<compile_context>
chip_gen: v5e
topology: v5e:2x2
jax: 0.10.0
libtpu: 0.0.40
codegen_flags: <defaults>
</compile_context>

<pallas_src>
import functools
import math

import jax
import jax.numpy as jnp
from jax.experimental import pallas as pl
from jax.experimental.pallas import tpu as pltpu


def _round_up(x, m):
    return (x + m - 1) // m * m


# --------------------------------------------------------------------------
# Fused kernel: timestep_embedding -> time_embed -> proj(+emb) -> blocks -> head
# --------------------------------------------------------------------------
def _fused_mlp_diffusion_kernel(
    t_ref,        # (TB, 1)        raw timesteps
    freqs_ref,    # (1, dim_t)     frequencies tiled twice: [freqs | freqs]
    x_ref,        # (TB, d_in)
    biases_ref,   # (n_bias, maxW) packed, zero-padded biases
    time_w1_ref,  # (dim_t, dim_t)
    time_w2_ref,  # (dim_t, dim_t)
    proj_w_ref,   # (d_in, dim_t)
    *rest,        # n_blocks block weights..., head weight (lane-padded), out_ref
    n_blocks,
    dim_t,
):
    block_w_refs = rest[:n_blocks]
    head_w_ref = rest[n_blocks]
    out_ref = rest[n_blocks + 1]

    def bias(i, width):
        row = biases_ref[pl.ds(i, 1), :]       # (1, maxW) — static row index
        return row[:, :width]                  # (1, width), broadcasts over batch

    # --- sinusoidal timestep embedding (cos on lanes [0,half), sin after) ----
    half = dim_t // 2
    args = t_ref[...] * freqs_ref[...]          # (TB, dim_t) via broadcasts
    lane = jax.lax.broadcasted_iota(jnp.int32, args.shape, 1)
    temb = jnp.where(lane < half, jnp.cos(args), jnp.sin(args))
    if dim_t % 2:                               # torch pads a zero column for odd dim
        temb = jnp.where(lane < 2 * half, temb, 0.0)

    # --- time_embed: Linear -> SiLU -> Linear --------------------------------
    h = jnp.dot(temb, time_w1_ref[...], preferred_element_type=jnp.float32)
    h = h + bias(0, time_w1_ref.shape[1])
    h = h * (1.0 / (1.0 + jnp.exp(-h)))         # SiLU (exp -> EUP slot)
    emb = jnp.dot(h, time_w2_ref[...], preferred_element_type=jnp.float32)
    emb = emb + bias(1, time_w2_ref.shape[1])

    # --- proj(x) + emb --------------------------------------------------------
    h = jnp.dot(x_ref[...], proj_w_ref[...], preferred_element_type=jnp.float32)
    h = h + bias(2, proj_w_ref.shape[1]) + emb

    # --- MLP blocks: Linear -> ReLU (dropout p=0 -> identity) ----------------
    for li in range(n_blocks):
        w_ref = block_w_refs[li]
        h = jnp.dot(h, w_ref[...], preferred_element_type=jnp.float32)
        h = jnp.maximum(h + bias(3 + li, w_ref.shape[1]), 0.0)

    # --- head (output width lane-padded to a multiple of 128) ----------------
    o = jnp.dot(h, head_w_ref[...], preferred_element_type=jnp.float32)
    out_ref[...] = o + bias(3 + n_blocks, head_w_ref.shape[1])


# --------------------------------------------------------------------------
# Wrapper
# --------------------------------------------------------------------------
def timestep_embedding(timesteps, dim, max_period=10000.0):
    """Pure-JAX sinusoidal embedding (used only by the reference)."""
    half = dim // 2
    freqs = jnp.exp(
        -math.log(max_period) * jnp.arange(half, dtype=jnp.float32) / half)
    args = timesteps.astype(jnp.float32)[:, None] * freqs[None, :]
    emb = jnp.concatenate([jnp.cos(args), jnp.sin(args)], axis=-1)
    if dim % 2:
        emb = jnp.concatenate([emb, jnp.zeros_like(emb[:, :1])], axis=-1)
    return emb


def mlp_diffusion_forward(params, x, timesteps):
    B, d_in = x.shape
    dim_t = params["time_w1"].shape[0]
    blocks = params["blocks"]
    n_blocks = len(blocks)
    d_out = params["head_w"].shape[1]
    d_out_pad = _round_up(d_out, 128)
    d_last = params["head_w"].shape[0]

    # Lane-pad the head so the kernel's output stores are full 128-lane vst.
    head_w_p = jnp.zeros((d_last, d_out_pad), jnp.float32).at[:, :d_out].set(
        params["head_w"])
    head_b_p = jnp.zeros((d_out_pad,), jnp.float32).at[:d_out].set(
        params["head_b"])

    # Pack every bias into one (n_bias, maxW) array (single DMA).
    maxW = max([dim_t, d_out_pad] + [blk["w"].shape[1] for blk in blocks])

    def pad_row(b):
        return jnp.zeros((maxW,), jnp.float32).at[: b.shape[0]].set(b)

    bias_rows = [pad_row(params["time_b1"]), pad_row(params["time_b2"]),
                 pad_row(params["proj_b"])]
    bias_rows += [pad_row(blk["b"]) for blk in blocks]
    bias_rows.append(pad_row(head_b_p))
    biases = jnp.stack(bias_rows, axis=0)
    n_bias = biases.shape[0]

    # Frequencies, tiled twice so lane j holds freqs[j % half]  (cos | sin).
    half = dim_t // 2
    freqs = jnp.exp(
        -math.log(10000.0) * jnp.arange(half, dtype=jnp.float32) / half)
    freqs_full = (jnp.zeros((1, dim_t), jnp.float32)
                  .at[0, :half].set(freqs)
                  .at[0, half:2 * half].set(freqs))

    # Batch-parallel grid; zero-pad the batch so any B works.
    TB = _round_up(B, 8) if B <= 128 else 128
    B_pad = _round_up(B, TB)
    x_p = x.astype(jnp.float32)
    t_p = timesteps.astype(jnp.float32).reshape(-1, 1)
    if B_pad != B:
        x_p = jnp.zeros((B_pad, d_in), jnp.float32).at[:B].set(x_p)
        t_p = jnp.zeros((B_pad, 1), jnp.float32).at[:B].set(t_p)
    grid = (B_pad // TB,)

    weight_arrays = ([params["time_w1"], params["time_w2"], params["proj_w"]]
                     + [blk["w"] for blk in blocks] + [head_w_p])

    in_specs = [
        pl.BlockSpec((TB, 1), lambda i: (i, 0)),
        pl.BlockSpec((1, dim_t), lambda i: (0, 0)),
        pl.BlockSpec((TB, d_in), lambda i: (i, 0)),
        pl.BlockSpec((n_bias, maxW), lambda i: (0, 0)),
    ] + [pl.BlockSpec(w.shape, lambda i: (0, 0)) for w in weight_arrays]

    out_specs = pl.BlockSpec((TB, d_out_pad), lambda i: (i, 0))

    kernel = functools.partial(_fused_mlp_diffusion_kernel,
                               n_blocks=n_blocks, dim_t=dim_t)

    out_pad = pl.pallas_call(
        kernel,
        out_shape=jax.ShapeDtypeStruct((B_pad, d_out_pad), jnp.float32),
        grid=grid,
        in_specs=in_specs,
        out_specs=out_specs,
        compiler_params=pltpu.CompilerParams(
            dimension_semantics=("parallel",)),
    )(t_p, freqs_full, x_p, biases, *weight_arrays)

    return out_pad[:B, :d_out]


# --------------------------------------------------------------------------
# Parameter init (PyTorch nn.Linear default init) + pure-JAX reference
# --------------------------------------------------------------------------
def init_mlp_diffusion_params(key, d_in, dim_t, d_layers):
    def linear_init(k, fan_in, fan_out):
        kw, kb = jax.random.split(k)
        bound = 1.0 / math.sqrt(fan_in)
        w = jax.random.uniform(kw, (fan_in, fan_out), jnp.float32, -bound, bound)
        b = jax.random.uniform(kb, (fan_out,), jnp.float32, -bound, bound)
        return w, b

    keys = jax.random.split(key, 4 + len(d_layers))
    params = {}
    params["time_w1"], params["time_b1"] = linear_init(keys[0], dim_t, dim_t)
    params["time_w2"], params["time_b2"] = linear_init(keys[1], dim_t, dim_t)
    params["proj_w"], params["proj_b"] = linear_init(keys[2], d_in, dim_t)
    blocks, prev = [], dim_t
    for i, d in enumerate(d_layers):
        w, b = linear_init(keys[3 + i], prev, d)
        blocks.append({"w": w, "b": b})
        prev = d
    params["blocks"] = blocks
    # MLP.make_baseline head: d_layers[-1] -> d_out (== d_in of the data)
    params["head_w"], params["head_b"] = linear_init(keys[3 + len(d_layers)],
                                                     prev, d_in)
    return params


def mlp_diffusion_ref(params, x, timesteps, dim_t):
    hp = jax.lax.Precision.HIGHEST
    temb = timestep_embedding(timesteps, dim_t)
    h = jnp.dot(temb, params["time_w1"], precision=hp) + params["time_b1"]
    h = h * jax.nn.sigmoid(h)
    emb = jnp.dot(h, params["time_w2"], precision=hp) + params["time_b2"]
    h = jnp.dot(x, params["proj_w"], precision=hp) + params["proj_b"] + emb
    for blk in params["blocks"]:
        h = jnp.maximum(jnp.dot(h, blk["w"], precision=hp) + blk["b"], 0.0)
    return jnp.dot(h, params["head_w"], precision=hp) + params["head_b"]


# --------------------------------------------------------------------------
if __name__ == "__main__":
    batch = 8
    d_in = 16                 # tabular feature dim (also the model output dim)
    dim_t = 128               # MLPDiffusion default
    d_layers = [128, 128]     # rtdl MLP hidden layers (lane-dense)

    key = jax.random.PRNGKey(0)
    kp, kx, kt = jax.random.split(key, 3)
    params = init_mlp_diffusion_params(kp, d_in, dim_t, d_layers)
    x = jax.random.normal(kx, (batch, d_in), dtype=jnp.float32)
    timesteps = jax.random.uniform(kt, (batch,), jnp.float32, 0.0, 1000.0)

    fwd = jax.jit(mlp_diffusion_forward)
    out = jax.block_until_ready(fwd(params, x, timesteps))

    ref = mlp_diffusion_ref(params, x, timesteps, dim_t)
    assert out.shape == (batch, d_in)
    err = float(jnp.max(jnp.abs(out - ref)))
    assert jnp.allclose(out, ref, atol=5e-3, rtol=5e-3), f"max abs err {err}"

    print("KERNEL_OK")
</pallas_src>

<mosaic_0001>
module attributes {stable_mosaic.version = 11 : i64} {
  func.func @_fused_mlp_diffusion_kernel(%arg0: i32, %arg1: memref<8x1xf32, #tpu.memory_space<vmem>>, %arg2: memref<1x128xf32, #tpu.memory_space<vmem>>, %arg3: memref<8x16xf32, #tpu.memory_space<vmem>>, %arg4: memref<6x128xf32, #tpu.memory_space<vmem>>, %arg5: memref<128x128xf32, #tpu.memory_space<vmem>>, %arg6: memref<128x128xf32, #tpu.memory_space<vmem>>, %arg7: memref<16x128xf32, #tpu.memory_space<vmem>>, %arg8: memref<128x128xf32, #tpu.memory_space<vmem>>, %arg9: memref<128x128xf32, #tpu.memory_space<vmem>>, %arg10: memref<128x128xf32, #tpu.memory_space<vmem>>, %arg11: memref<8x128xf32, #tpu.memory_space<vmem>>) attributes {dimension_semantics = [#tpu.dimension_semantics<parallel>], iteration_bounds = array<i64: 1>, scalar_prefetch = 0 : i64, scratch_operands = 0 : i64, tpu.core_type = #tpu.core_type<tc>, window_params = [{transform_indices = @transform_0, window_bounds = array<i64: 8, 1>}, {pipeline_mode = #tpu.pipeline_mode<synchronous>, transform_indices = @transform_1, window_bounds = array<i64: 1, 128>}, {transform_indices = @transform_2, window_bounds = array<i64: 8, 16>}, {pipeline_mode = #tpu.pipeline_mode<synchronous>, transform_indices = @transform_3, window_bounds = array<i64: 6, 128>}, {pipeline_mode = #tpu.pipeline_mode<synchronous>, transform_indices = @transform_4, window_bounds = array<i64: 128, 128>}, {pipeline_mode = #tpu.pipeline_mode<synchronous>, transform_indices = @transform_5, window_bounds = array<i64: 128, 128>}, {pipeline_mode = #tpu.pipeline_mode<synchronous>, transform_indices = @transform_6, window_bounds = array<i64: 16, 128>}, {pipeline_mode = #tpu.pipeline_mode<synchronous>, transform_indices = @transform_7, window_bounds = array<i64: 128, 128>}, {pipeline_mode = #tpu.pipeline_mode<synchronous>, transform_indices = @transform_8, window_bounds = array<i64: 128, 128>}, {pipeline_mode = #tpu.pipeline_mode<synchronous>, transform_indices = @transform_9, window_bounds = array<i64: 128, 128>}, {transform_indices = @transform_10, window_bounds = array<i64: 8, 128>}]} {
    %c0 = arith.constant 0 : index
    %c0_0 = arith.constant 0 : index
    %0 = vector.load %arg1[%c0, %c0_0] : memref<8x1xf32, #tpu.memory_space<vmem>>, vector<8x1xf32>
    %c0_1 = arith.constant 0 : index
    %c0_2 = arith.constant 0 : index
    %1 = vector.load %arg2[%c0_1, %c0_2] : memref<1x128xf32, #tpu.memory_space<vmem>>, vector<1x128xf32>
    %2 = vector.broadcast %0 : vector<8x1xf32> to vector<8x128xf32>
    %3 = vector.broadcast %1 : vector<1x128xf32> to vector<8x128xf32>
    %4 = arith.mulf %2, %3 : vector<8x128xf32>
    %5 = tpu.iota {dimensions = array<i32: 1>} : vector<8x128xi32>
    %c64_i32 = arith.constant 64 : i32
    %6 = vector.broadcast %c64_i32 : i32 to vector<8x128xi32>
    %7 = arith.cmpi slt, %5, %6 : vector<8x128xi32>
    %8 = math.cos %4 : vector<8x128xf32>
    %9 = math.sin %4 : vector<8x128xf32>
    %10 = arith.select %7, %8, %9 : vector<8x128xi1>, vector<8x128xf32>
    %c0_3 = arith.constant 0 : index
    %c0_4 = arith.constant 0 : index
    %11 = vector.load %arg5[%c0_3, %c0_4] : memref<128x128xf32, #tpu.memory_space<vmem>>, vector<128x128xf32>
    %cst = arith.constant dense<0.000000e+00> : vector<8x128xf32>
    %12 = tpu.matmul %10, %11, %cst {dimension_numbers = #tpu.dot_dimension_numbers<[1], [0], [0], [1], [0, 0, 1, 1], [], []>} : vector<8x128xf32>, vector<128x128xf32>, vector<8x128xf32> -> vector<8x128xf32>
    %c0_5 = arith.constant 0 : index
    %c0_6 = arith.constant 0 : index
    %13 = vector.load %arg4[%c0_5, %c0_6] : memref<6x128xf32, #tpu.memory_space<vmem>>, vector<1x128xf32>
    %14 = vector.broadcast %13 : vector<1x128xf32> to vector<8x128xf32>
    %15 = arith.addf %12, %14 : vector<8x128xf32>
    %cst_7 = arith.constant 0.000000e+00 : f32
    %16 = vector.broadcast %cst_7 : f32 to vector<8x128xf32>
    %17 = arith.subf %16, %15 : vector<8x128xf32>
    %18 = math.exp %17 : vector<8x128xf32>
    %cst_8 = arith.constant 1.000000e+00 : f32
    %19 = vector.broadcast %cst_8 : f32 to vector<8x128xf32>
    %20 = arith.addf %19, %18 : vector<8x128xf32>
    %cst_9 = arith.constant 1.000000e+00 : f32
    %21 = vector.broadcast %cst_9 : f32 to vector<8x128xf32>
    %22 = arith.divf %21, %20 : vector<8x128xf32>
    %23 = arith.mulf %15, %22 : vector<8x128xf32>
    %c0_10 = arith.constant 0 : index
    %c0_11 = arith.constant 0 : index
    %24 = vector.load %arg6[%c0_10, %c0_11] : memref<128x128xf32, #tpu.memory_space<vmem>>, vector<128x128xf32>
    %cst_12 = arith.constant dense<0.000000e+00> : vector<8x128xf32>
    %25 = tpu.matmul %23, %24, %cst_12 {dimension_numbers = #tpu.dot_dimension_numbers<[1], [0], [0], [1], [0, 0, 1, 1], [], []>} : vector<8x128xf32>, vector<128x128xf32>, vector<8x128xf32> -> vector<8x128xf32>
    %c1 = arith.constant 1 : index
    %c0_13 = arith.constant 0 : index
    %26 = vector.load %arg4[%c1, %c0_13] : memref<6x128xf32, #tpu.memory_space<vmem>>, vector<1x128xf32>
    %27 = vector.broadcast %26 : vector<1x128xf32> to vector<8x128xf32>
    %28 = arith.addf %25, %27 : vector<8x128xf32>
    %c0_14 = arith.constant 0 : index
    %c0_15 = arith.constant 0 : index
    %29 = vector.load %arg3[%c0_14, %c0_15] : memref<8x16xf32, #tpu.memory_space<vmem>>, vector<8x16xf32>
    %c0_16 = arith.constant 0 : index
    %c0_17 = arith.constant 0 : index
    %30 = vector.load %arg7[%c0_16, %c0_17] : memref<16x128xf32, #tpu.memory_space<vmem>>, vector<16x128xf32>
    %cst_18 = arith.constant dense<0.000000e+00> : vector<8x128xf32>
    %31 = tpu.matmul %29, %30, %cst_18 {dimension_numbers = #tpu.dot_dimension_numbers<[1], [0], [0], [1], [0, 0, 1, 1], [], []>} : vector<8x16xf32>, vector<16x128xf32>, vector<8x128xf32> -> vector<8x128xf32>
    %c2 = arith.constant 2 : index
    %c0_19 = arith.constant 0 : index
    %32 = vector.load %arg4[%c2, %c0_19] : memref<6x128xf32, #tpu.memory_space<vmem>>, vector<1x128xf32>
    %33 = vector.broadcast %32 : vector<1x128xf32> to vector<8x128xf32>
    %34 = arith.addf %31, %33 : vector<8x128xf32>
    %35 = arith.addf %34, %28 : vector<8x128xf32>
    %c0_20 = arith.constant 0 : index
    %c0_21 = arith.constant 0 : index
    %36 = vector.load %arg8[%c0_20, %c0_21] : memref<128x128xf32, #tpu.memory_space<vmem>>, vector<128x128xf32>
    %cst_22 = arith.constant dense<0.000000e+00> : vector<8x128xf32>
    %37 = tpu.matmul %35, %36, %cst_22 {dimension_numbers = #tpu.dot_dimension_numbers<[1], [0], [0], [1], [0, 0, 1, 1], [], []>} : vector<8x128xf32>, vector<128x128xf32>, vector<8x128xf32> -> vector<8x128xf32>
    %c3 = arith.constant 3 : index
    %c0_23 = arith.constant 0 : index
    %38 = vector.load %arg4[%c3, %c0_23] : memref<6x128xf32, #tpu.memory_space<vmem>>, vector<1x128xf32>
    %39 = vector.broadcast %38 : vector<1x128xf32> to vector<8x128xf32>
    %40 = arith.addf %37, %39 : vector<8x128xf32>
    %cst_24 = arith.constant 0.000000e+00 : f32
    %41 = vector.broadcast %cst_24 : f32 to vector<8x128xf32>
    %42 = arith.maximumf %40, %41 : vector<8x128xf32>
    %c0_25 = arith.constant 0 : index
    %c0_26 = arith.constant 0 : index
    %43 = vector.load %arg9[%c0_25, %c0_26] : memref<128x128xf32, #tpu.memory_space<vmem>>, vector<128x128xf32>
    %cst_27 = arith.constant dense<0.000000e+00> : vector<8x128xf32>
    %44 = tpu.matmul %42, %43, %cst_27 {dimension_numbers = #tpu.dot_dimension_numbers<[1], [0], [0], [1], [0, 0, 1, 1], [], []>} : vector<8x128xf32>, vector<128x128xf32>, vector<8x128xf32> -> vector<8x128xf32>
    %c4 = arith.constant 4 : index
    %c0_28 = arith.constant 0 : index
    %45 = vector.load %arg4[%c4, %c0_28] : memref<6x128xf32, #tpu.memory_space<vmem>>, vector<1x128xf32>
    %46 = vector.broadcast %45 : vector<1x128xf32> to vector<8x128xf32>
    %47 = arith.addf %44, %46 : vector<8x128xf32>
    %cst_29 = arith.constant 0.000000e+00 : f32
    %48 = vector.broadcast %cst_29 : f32 to vector<8x128xf32>
    %49 = arith.maximumf %47, %48 : vector<8x128xf32>
    %c0_30 = arith.constant 0 : index
    %c0_31 = arith.constant 0 : index
    %50 = vector.load %arg10[%c0_30, %c0_31] : memref<128x128xf32, #tpu.memory_space<vmem>>, vector<128x128xf32>
    %cst_32 = arith.constant dense<0.000000e+00> : vector<8x128xf32>
    %51 = tpu.matmul %49, %50, %cst_32 {dimension_numbers = #tpu.dot_dimension_numbers<[1], [0], [0], [1], [0, 0, 1, 1], [], []>} : vector<8x128xf32>, vector<128x128xf32>, vector<8x128xf32> -> vector<8x128xf32>
    %c5 = arith.constant 5 : index
    %c0_33 = arith.constant 0 : index
    %52 = vector.load %arg4[%c5, %c0_33] : memref<6x128xf32, #tpu.memory_space<vmem>>, vector<1x128xf32>
    %53 = vector.broadcast %52 : vector<1x128xf32> to vector<8x128xf32>
    %54 = arith.addf %51, %53 : vector<8x128xf32>
    %c0_34 = arith.constant 0 : index
    %c0_35 = arith.constant 0 : index
    %55 = vector.load %arg11[%c0_34, %c0_35] : memref<8x128xf32, #tpu.memory_space<vmem>>, vector<8x128xf32>
    tpu.vector_store %arg11[%c0_34, %c0_35], %54 {strides = array<i32>} : memref<8x128xf32, #tpu.memory_space<vmem>>, vector<8x128xf32>,
    return
  }
  func.func @transform_0(%arg0: i32) -> (i32, i32) {
    %c0_i32 = arith.constant 0 : i32
    %c0_i32_0 = arith.constant 0 : i32
    return %arg0, %c0_i32 : i32, i32
  }
  func.func @transform_1(%arg0: i32) -> (i32, i32) {
    %c0_i32 = arith.constant 0 : i32
    %c0_i32_0 = arith.constant 0 : i32
    %c0_i32_1 = arith.constant 0 : i32
    return %c0_i32, %c0_i32_0 : i32, i32
  }
  func.func @transform_2(%arg0: i32) -> (i32, i32) {
    %c0_i32 = arith.constant 0 : i32
    %c0_i32_0 = arith.constant 0 : i32
    return %arg0, %c0_i32 : i32, i32
  }
  func.func @transform_3(%arg0: i32) -> (i32, i32) {
    %c0_i32 = arith.constant 0 : i32
    %c0_i32_0 = arith.constant 0 : i32
    %c0_i32_1 = arith.constant 0 : i32
    return %c0_i32, %c0_i32_0 : i32, i32
  }
  func.func @transform_4(%arg0: i32) -> (i32, i32) {
    %c0_i32 = arith.constant 0 : i32
    %c0_i32_0 = arith.constant 0 : i32
    %c0_i32_1 = arith.constant 0 : i32
    return %c0_i32, %c0_i32_0 : i32, i32
  }
  func.func @transform_5(%arg0: i32) -> (i32, i32) {
    %c0_i32 = arith.constant 0 : i32
    %c0_i32_0 = arith.constant 0 : i32
    %c0_i32_1 = arith.constant 0 : i32
    return %c0_i32, %c0_i32_0 : i32, i32
  }
  func.func @transform_6(%arg0: i32) -> (i32, i32) {
    %c0_i32 = arith.constant 0 : i32
    %c0_i32_0 = arith.constant 0 : i32
    %c0_i32_1 = arith.constant 0 : i32
    return %c0_i32, %c0_i32_0 : i32, i32
  }
  func.func @transform_7(%arg0: i32) -> (i32, i32) {
    %c0_i32 = arith.constant 0 : i32
    %c0_i32_0 = arith.constant 0 : i32
    %c0_i32_1 = arith.constant 0 : i32
    return %c0_i32, %c0_i32_0 : i32, i32
  }
  func.func @transform_8(%arg0: i32) -> (i32, i32) {
    %c0_i32 = arith.constant 0 : i32
    %c0_i32_0 = arith.constant 0 : i32
    %c0_i32_1 = arith.constant 0 : i32
    return %c0_i32, %c0_i32_0 : i32, i32
  }
  func.func @transform_9(%arg0: i32) -> (i32, i32) {
    %c0_i32 = arith.constant 0 : i32
    %c0_i32_0 = arith.constant 0 : i32
    %c0_i32_1 = arith.constant 0 : i32
    return %c0_i32, %c0_i32_0 : i32, i32
  }
  func.func @transform_10(%arg0: i32) -> (i32, i32) {
    %c0_i32 = arith.constant 0 : i32
    %c0_i32_0 = arith.constant 0 : i32
    return %arg0, %c0_i32 : i32, i32
  }
}

</mosaic_0001>

<llo_original>
// kernel: mlp_diffusion_forward.1
$region0: #{mlp_diffusion_forward.1}
  #allocation0 [shape = 'u32[]', space=smem, size = 0x4, offset = 0x4, fixed_abs, tag = 'smem constant byte address 0x4 - core index']
  #allocation1 [shape = 'u32[72,128]{1,0:T(1,128)}', space=vmem, size = 0x9000, scoped, tag = 'internal scratch']
  %s0 = inlined_call_operand.vmem [shape: f32[8,1], index: 0, kind: input, shape index: {}]
  %s1 = inlined_call_operand.vmem [shape: f32[1,128], index: 1, kind: input, shape index: {}]
  %s2 = inlined_call_operand.vmem [shape: f32[8,16], index: 2, kind: input, shape index: {}]
  %s3 = inlined_call_operand.vmem [shape: f32[6,128], index: 3, kind: input, shape index: {}]
  %s4 = inlined_call_operand.vmem [shape: f32[128,128], index: 4, kind: input, shape index: {}]
  %s5 = inlined_call_operand.vmem [shape: f32[128,128], index: 5, kind: input, shape index: {}]
  %s6 = inlined_call_operand.vmem [shape: f32[16,128], index: 6, kind: input, shape index: {}]
  %s7 = inlined_call_operand.vmem [shape: f32[128,128], index: 7, kind: input, shape index: {}]
  %s8 = inlined_call_operand.vmem [shape: f32[128,128], index: 8, kind: input, shape index: {}]
  %s9 = inlined_call_operand.vmem [shape: f32[128,128], index: 9, kind: input, shape index: {}]
  %s10 = inlined_call_operand.hbm [shape: f32[8,128], index: 10, kind: output, shape index: {}]
  %s11 = sld [smem:[#allocation0]]
  $region50: #{mlp_diffusion_forward.1} parent=0
    _
  %s13 = ssub.s32 1, %s11
  %s14 = scalar_select 0, %s13, %s11
  $region1: #{mlp_diffusion_forward.1} parent=0
    #allocation2 [shape = 'u8[4096]{0}', space=vmem, size = 0x1000, scoped, tag = 'output window, operand 0, single buffered']
    #allocation3 [shape = 's32[1]{0}', space=sflag, size = 0x4, scoped, tag = 'scoped memory for mlp_diffusion_forward.1']
    %15 = vsyncpa [#allocation3], 0
    // Predicated region
    $region2: #{mlp_diffusion_forward.1} parent=1 // pred_check
      _
    $region3: #{mlp_diffusion_forward.1} parent=1 // pred_check_branch
      %17 = sbr.rel (0) target = $region5
    $region4: #{mlp_diffusion_forward.1} parent=1 // pred_region
      _
    $region5: #{mlp_diffusion_forward.1} parent=1 // pred_fallthru
      _
    // Predicated region
    $region6: #{mlp_diffusion_forward.1} parent=1 // pred_check
      _
    $region7: #{mlp_diffusion_forward.1} parent=1 // pred_check_branch
      %19 = sbr.rel (0) target = $region9
    $region8: #{mlp_diffusion_forward.1} parent=1 // pred_region
      _
    $region9: #{mlp_diffusion_forward.1} parent=1 // pred_fallthru
      _
    // Predicated region
    $region10: #{mlp_diffusion_forward.1} parent=1 // pred_check
      _
    $region11: #{mlp_diffusion_forward.1} parent=1 // pred_check_branch
      %21 = sbr.rel (0) target = $region13
    $region12: #{mlp_diffusion_forward.1} parent=1 // pred_region
      _
    $region13: #{mlp_diffusion_forward.1} parent=1 // pred_fallthru
      _
    // Predicated region
    $region14: #{mlp_diffusion_forward.1} parent=1 // pred_check
      _
    $region15: #{mlp_diffusion_forward.1} parent=1 // pred_check_branch
      %23 = sbr.rel (0) target = $region17
    $region16: #{mlp_diffusion_forward.1} parent=1 // pred_region
      _
    $region17: #{mlp_diffusion_forward.1} parent=1 // pred_fallthru
      _
    // Predicated region
    $region18: #{mlp_diffusion_forward.1} parent=1 // pred_check
      _
    $region19: #{mlp_diffusion_forward.1} parent=1 // pred_check_branch
      %25 = sbr.rel (0) target = $region21
    $region20: #{mlp_diffusion_forward.1} parent=1 // pred_region
      _
    $region21: #{mlp_diffusion_forward.1} parent=1 // pred_fallthru
      _
    // Predicated region
    $region22: #{mlp_diffusion_forward.1} parent=1 // pred_check
      _
    $region23: #{mlp_diffusion_forward.1} parent=1 // pred_check_branch
      %27 = sbr.rel (0) target = $region25
    $region24: #{mlp_diffusion_forward.1} parent=1 // pred_region
      _
    $region25: #{mlp_diffusion_forward.1} parent=1 // pred_fallthru
      _
    // Predicated region
    $region26: #{mlp_diffusion_forward.1} parent=1 // pred_check
      _
    $region27: #{mlp_diffusion_forward.1} parent=1 // pred_check_branch
      %29 = sbr.rel (0) target = $region29
    $region28: #{mlp_diffusion_forward.1} parent=1 // pred_region
      _
    $region29: #{mlp_diffusion_forward.1} parent=1 // pred_fallthru
      _
    // Predicated region
    $region30: #{mlp_diffusion_forward.1} parent=1 // pred_check
      _
    $region31: #{mlp_diffusion_forward.1} parent=1 // pred_check_branch
      %31 = sbr.rel (0) target = $region33
    $region32: #{mlp_diffusion_forward.1} parent=1 // pred_region
      _
    $region33: #{mlp_diffusion_forward.1} parent=1 // pred_fallthru
      _
    // Predicated region
    $region34: #{mlp_diffusion_forward.1} parent=1 // pred_check
      _
    $region35: #{mlp_diffusion_forward.1} parent=1 // pred_check_branch
      %33 = sbr.rel (0) target = $region37
    $region36: #{mlp_diffusion_forward.1} parent=1 // pred_region
      _
    $region37: #{mlp_diffusion_forward.1} parent=1 // pred_fallthru
      _
    // Predicated region
    $region38: #{mlp_diffusion_forward.1} parent=1 // pred_check
      _
    $region39: #{mlp_diffusion_forward.1} parent=1 // pred_check_branch
      %35 = sbr.rel (0) target = $region41
    $region40: #{mlp_diffusion_forward.1} parent=1 // pred_region
      _
    $region41: #{mlp_diffusion_forward.1} parent=1 // pred_fallthru
      _
    %v36 = vld [vmem:[%s0] sm:$0xff]
    %v37 = vld [vmem:[%s1] sm:$0x1]
    %39 = vset.pattern.permute.xlu0 0
    %40 = vperm.xlu0 %39, %v36
    %v41 = vpop.permute.xlu0 %40
    %v44 = vperm.slane %v37, 0
    %v46 = vmul.f32 %v41, %v44
    %v47 = vlaneseq
    %v48 = vand.u32 %v47, 127
    %vm49 = vcmp.lt.s32.totalorder %v48, 64
    %v50 = vand.u32 2147483647, %v46
    %vm51 = vcmp.le.f32.partialorder %v50, 0.7853982
    %vm52 = vcmp.lt.s32.totalorder %v46, 0
    %v53 = vand.u32 %v46, 2139095040
    %v54 = vshrl.u32 %v53, 23
    %v55 = vsub.s32 %v54, 127
    %v56 = vand.u32 2147483647, %v46
    %v57 = vand.u32 %v56, 8388607
    %v58 = vor.u32 %v57, 8388608
    %v59 = vsub.s32 0, %v58
    %v60 = vadd.s32 %v55, 1
    %vm61 = vcmp.gt.s32.totalorder %v60, 0
    %v62 = vsel %vm61, %v60, 0
    %v63 = vshrl.u32 %v62, 5
    %v64 = vand.u32 %v62, 31
    %v65 = vsub.s32 32, %v64
    %v66 = vshrl.u32 683565275, %v65
    %v67 = vshll.u32 683565275, %v64
    %v68 = vshrl.u32 2475754826, %v65
    %v69 = vor.u32 %v67, %v68
    %v70 = vshll.u32 2475754826, %v64
    %v71 = vshrl.u32 2131351028, %v65
    %v72 = vor.u32 %v70, %v71
    %v73 = vshll.u32 2131351028, %v64
    %v74 = vshrl.u32 2102212464, %v65
    %v75 = vor.u32 %v73, %v74
    %v76 = vshll.u32 2102212464, %v64
    %v77 = vshrl.u32 920167782, %v65
    %v78 = vor.u32 %v76, %v77
    %v79 = vshll.u32 920167782, %v64
    %v80 = vshrl.u32 1326507024, %v65
    %v81 = vor.u32 %v79, %v80
    %vm82 = vcmp.lt.s32.totalorder %v63, 1
    %vm83 = vcmp.lt.s32.totalorder %v63, 2
    %vm84 = vcmp.lt.s32.totalorder %v63, 3
    %vm85 = vcmp.lt.s32.totalorder %v63, 4
    %v86 = vsel %vm82, %v66, %v69
    %v87 = vsel %vm85, %v75, 2102212464
    %v88 = vsel %vm84, %v72, %v87
    %v89 = vsel %vm83, %v86, %v88
    %v90 = vsel %vm82, %v69, %v72
    %v91 = vsel %vm85, %v78, 920167782
    %v92 = vsel %vm84, %v75, %v91
    %v93 = vsel %vm83, %v90, %v92
    %v94 = vsel %vm82, %v72, %v75
    %v95 = vsel %vm85, %v81, 1326507024
    %v96 = vsel %vm84, %v78, %v95
    %v97 = vsel %vm83, %v94, %v96
    %v98 = vshll.u32 %v58, 8
    %v99 = vand.u32 %v98, 65535
    %v100 = vshrl.u32 %v98, 16
    %v101 = vand.u32 %v97, 65535
    %v102 = vshrl.u32 %v97, 16
    %v103 = vmul.u32 %v99, %v101
    %v104 = vmul.u32 %v99, %v102
    %v105 = vmul.u32 %v100, %v101
    %v106 = vmul.u32 %v100, %v102
    %v107 = vshll.u32 %v104, 16
    %v108 = vshrl.u32 %v104, 16
    %v109 = vshll.u32 %v105, 16
    %v110 = vshrl.u32 %v105, 16
    %vm111 = vc.u32 %v103, %v107
    %v112 = vsel %vm111, 1, 0
    %v113 = vadd.s32 %v103, %v107
    %v114 = vadd.s32 %v106, %v112
    %vm115 = vc.u32 %v113, %v109
    %v116 = vsel %vm115, 1, 0
    %v117 = vadd.s32 %v113, %v109
    %v118 = vadd.s32 %v114, %v116
    %v119 = vadd.s32 %v118, %v108
    %v120 = vadd.s32 %v119, %v110
    %v121 = vand.u32 %v98, 65535
    %v122 = vshrl.u32 %v98, 16
    %v123 = vand.u32 %v93, 65535
    %v124 = vshrl.u32 %v93, 16
    %v125 = vmul.u32 %v121, %v123
    %v126 = vmul.u32 %v121, %v124
    %v127 = vmul.u32 %v122, %v123
    %v128 = vmul.u32 %v122, %v124
    %v129 = vshll.u32 %v126, 16
    %v130 = vshrl.u32 %v126, 16
    %v131 = vshll.u32 %v127, 16
    %v132 = vshrl.u32 %v127, 16
    %vm133 = vc.u32 %v125, %v129
    %v134 = vsel %vm133, 1, 0
    %v135 = vadd.s32 %v125, %v129
    %v136 = vadd.s32 %v128, %v134
    %vm137 = vc.u32 %v135, %v131
    %v138 = vsel %vm137, 1, 0
    %v139 = vadd.s32 %v135, %v131
    %v140 = vadd.s32 %v136, %v138
    %v141 = vadd.s32 %v140, %v130
    %v142 = vadd.s32 %v141, %v132
    %v143 = vmul.u32 %v98, %v89
    %v144 = vadd.s32 %v120, %v139
    %vm145 = vc.u32 %v120, %v139
    %v146 = vadd.s32 %v142, 1
    %v147 = vsel %vm145, %v146, %v142
    %v148 = vadd.s32 %v143, %v147
    %v149 = vadd.s32 %v148, 536870912
    %v150 = vshrl.u32 %v149, 30
    %v151 = vshll.u32 %v150, 30
    %v152 = vsub.s32 %v148, %v151
    %vm153 = vcmp.lt.s32.totalorder %v152, 0
    %v154 = vsub.s32 0, %v152
    %v155 = vsel %vm153, %v154, %v152
    %v156 = vclz %v155
    %v157 = vsub.s32 %v156, 2
    %vm158 = vcmp.gt.s32.totalorder 0, %v157
    %v159 = vsel %vm158, 0, %v157
    %v160 = vsub.s32 32, %v159
    %v161 = vshll.u32 %v152, %v159
    %v162 = vshrl.u32 %v144, %v160
    %v163 = vor.u32 %v161, %v162
    %v164 = vsub.s32 4294967266, %v159
    %v165 = vadd.s32 %v164, 127
    %v166 = vshll.u32 %v165, 23
    %v167 = vor.u32 4788187, %v166
    %v168 = vand.u32 2147483647, %v167
    %v170 = vcvt.s32.f32 %v163
    %v171 = vmul.f32 %v170, %v168
    %v172 = vxor.u32 %v171, 2147483648
    %v173 = vsel %vm52, %v172, %v171
    %v174 = vsub.s32 4, %v150
    %v175 = vsel %vm52, %v174, %v150
    %v176 = vsel %vm51, %v46, %v173
    %v177 = vsel %vm51, 0, %v175
    %v178 = vmul.f32 %v176, %v176
    %v179 = vmul.f32 %v178, -0.001358992
    %v180 = vadd.f32 %v179, 0.041655596
    %v181 = vmul.f32 %v178, %v180
    %v182 = vadd.f32 %v181, -0.4999988
    %v183 = vmul.f32 %v178, %v182
    %v184 = vadd.f32 1.0, %v183
    %v185 = vmul.f32 %v176, %v176
    %v186 = vmul.f32 %v185, -0.00019511016
    %v187 = vadd.f32 %v186, 0.008332121
    %v188 = vmul.f32 %v185, %v187
    %v189 = vadd.f32 %v188, -0.16666654
    %v190 = vmul.f32 %v185, %v189
    %v191 = vadd.f32 %v190, 1.0
    %v192 = vmul.f32 %v191, %v176
    %vm193 = vweird.f32 %v46
    %v194 = vand.u32 %v177, 3
    %vm195 = vcmp.lt.s32.totalorder %v194, 2
    %vm196 = vcmp.eq.s32.totalorder %v194, 0
    %v197 = vxor.u32 %v192, 2147483648
    %v198 = vsel %vm196, %v184, %v197
    %vm199 = vcmp.eq.s32.totalorder %v194, 2
    %v200 = vxor.u32 %v184, 2147483648
    %v201 = vsel %vm199, %v200, %v192
    %v202 = vsel %vm195, %v198, %v201
    %v203 = vsel %vm193, nan, %v202
    %v204 = vand.u32 2147483647, %v46
    %vm205 = vcmp.le.f32.partialorder %v204, 0.7853982
    %vm206 = vcmp.lt.s32.totalorder %v46, 0
    %v207 = vand.u32 %v46, 2139095040
    %v208 = vshrl.u32 %v207, 23
    %v209 = vsub.s32 %v208, 127
    %v210 = vand.u32 2147483647, %v46
    %v211 = vand.u32 %v210, 8388607
    %v212 = vor.u32 %v211, 8388608
    %v213 = vsub.s32 0, %v212
    %v214 = vadd.s32 %v209, 1
    %vm215 = vcmp.gt.s32.totalorder %v214, 0
    %v216 = vsel %vm215, %v214, 0
    %v217 = vshrl.u32 %v216, 5
    %v218 = vand.u32 %v216, 31
    %v219 = vsub.s32 32, %v218
    %v220 = vshrl.u32 683565275, %v219
    %v221 = vshll.u32 683565275, %v218
    %v222 = vshrl.u32 2475754826, %v219
    %v223 = vor.u32 %v221, %v222
    %v224 = vshll.u32 2475754826, %v218
    %v225 = vshrl.u32 2131351028, %v219
    %v226 = vor.u32 %v224, %v225
    %v227 = vshll.u32 2131351028, %v218
    %v228 = vshrl.u32 2102212464, %v219
    %v229 = vor.u32 %v227, %v228
    %v230 = vshll.u32 2102212464, %v218
    %v231 = vshrl.u32 920167782, %v219
    %v232 = vor.u32 %v230, %v231
    %v233 = vshll.u32 920167782, %v218
    %v234 = vshrl.u32 1326507024, %v219
    %v235 = vor.u32 %v233, %v234
    %vm236 = vcmp.lt.s32.totalorder %v217, 1
    %vm237 = vcmp.lt.s32.totalorder %v217, 2
    %vm238 = vcmp.lt.s32.totalorder %v217, 3
    %vm239 = vcmp.lt.s32.totalorder %v217, 4
    %v240 = vsel %vm236, %v220, %v223
    %v241 = vsel %vm239, %v229, 2102212464
    %v242 = vsel %vm238, %v226, %v241
    %v243 = vsel %vm237, %v240, %v242
    %v244 = vsel %vm236, %v223, %v226
    %v245 = vsel %vm239, %v232, 920167782
    %v246 = vsel %vm238, %v229, %v245
    %v247 = vsel %vm237, %v244, %v246
    %v248 = vsel %vm236, %v226, %v229
    %v249 = vsel %vm239, %v235, 1326507024
    %v250 = vsel %vm238, %v232, %v249
    %v251 = vsel %vm237, %v248, %v250
    %v252 = vshll.u32 %v212, 8
    %v253 = vand.u32 %v252, 65535
    %v254 = vshrl.u32 %v252, 16
    %v255 = vand.u32 %v251, 65535
    %v256 = vshrl.u32 %v251, 16
    %v257 = vmul.u32 %v253, %v255
    %v258 = vmul.u32 %v253, %v256
    %v259 = vmul.u32 %v254, %v255
    %v260 = vmul.u32 %v254, %v256
    %v261 = vshll.u32 %v258, 16
    %v262 = vshrl.u32 %v258, 16
    %v263 = vshll.u32 %v259, 16
    %v264 = vshrl.u32 %v259, 16
    %vm265 = vc.u32 %v257, %v261
    %v266 = vsel %vm265, 1, 0
    %v267 = vadd.s32 %v257, %v261
    %v268 = vadd.s32 %v260, %v266
    %vm269 = vc.u32 %v267, %v263
    %v270 = vsel %vm269, 1, 0
    %v271 = vadd.s32 %v267, %v263
    %v272 = vadd.s32 %v268, %v270
    %v273 = vadd.s32 %v272, %v262
    %v274 = vadd.s32 %v273, %v264
    %v275 = vand.u32 %v252, 65535
    %v276 = vshrl.u32 %v252, 16
    %v277 = vand.u32 %v247, 65535
    %v278 = vshrl.u32 %v247, 16
    %v279 = vmul.u32 %v275, %v277
    %v280 = vmul.u32 %v275, %v278
    %v281 = vmul.u32 %v276, %v277
    %v282 = vmul.u32 %v276, %v278
    %v283 = vshll.u32 %v280, 16
    %v284 = vshrl.u32 %v280, 16
    %v285 = vshll.u32 %v281, 16
    %v286 = vshrl.u32 %v281, 16
    %vm287 = vc.u32 %v279, %v283
    %v288 = vsel %vm287, 1, 0
    %v289 = vadd.s32 %v279, %v283
    %v290 = vadd.s32 %v282, %v288
    %vm291 = vc.u32 %v289, %v285
    %v292 = vsel %vm291, 1, 0
    %v293 = vadd.s32 %v289, %v285
    %v294 = vadd.s32 %v290, %v292
    %v295 = vadd.s32 %v294, %v284
    %v296 = vadd.s32 %v295, %v286
    %v297 = vmul.u32 %v252, %v243
    %v298 = vadd.s32 %v274, %v293
    %vm299 = vc.u32 %v274, %v293
    %v300 = vadd.s32 %v296, 1
    %v301 = vsel %vm299, %v300, %v296
    %v302 = vadd.s32 %v297, %v301
    %v303 = vadd.s32 %v302, 536870912
    %v304 = vshrl.u32 %v303, 30
    %v305 = vshll.u32 %v304, 30
    %v306 = vsub.s32 %v302, %v305
    %vm307 = vcmp.lt.s32.totalorder %v306, 0
    %v308 = vsub.s32 0, %v306
    %v309 = vsel %vm307, %v308, %v306
    %v310 = vclz %v309
    %v311 = vsub.s32 %v310, 2
    %vm312 = vcmp.gt.s32.totalorder 0, %v311
    %v313 = vsel %vm312, 0, %v311
    %v314 = vsub.s32 32, %v313
    %v315 = vshll.u32 %v306, %v313
    %v316 = vshrl.u32 %v298, %v314
    %v317 = vor.u32 %v315, %v316
    %v318 = vsub.s32 4294967266, %v313
    %v319 = vadd.s32 %v318, 127
    %v320 = vshll.u32 %v319, 23
    %v321 = vor.u32 4788187, %v320
    %v322 = vand.u32 2147483647, %v321
    %v324 = vcvt.s32.f32 %v317
    %v325 = vmul.f32 %v324, %v322
    %v326 = vxor.u32 %v325, 2147483648
    %v327 = vsel %vm206, %v326, %v325
    %v328 = vsub.s32 4, %v304
    %v329 = vsel %vm206, %v328, %v304
    %v330 = vsel %vm205, %v46, %v327
    %v331 = vsel %vm205, 0, %v329
    %v332 = vmul.f32 %v330, %v330
    %v333 = vmul.f32 %v332, -0.001358992
    %v334 = vadd.f32 %v333, 0.041655596
    %v335 = vmul.f32 %v332, %v334
    %v336 = vadd.f32 %v335, -0.4999988
    %v337 = vmul.f32 %v332, %v336
    %v338 = vadd.f32 1.0, %v337
    %v339 = vmul.f32 %v330, %v330
    %v340 = vmul.f32 %v339, -0.00019511016
    %v341 = vadd.f32 %v340, 0.008332121
    %v342 = vmul.f32 %v339, %v341
    %v343 = vadd.f32 %v342, -0.16666654
    %v344 = vmul.f32 %v339, %v343
    %v345 = vadd.f32 %v344, 1.0
    %v346 = vmul.f32 %v345, %v330
    %vm347 = vweird.f32 %v46
    %v348 = vadd.s32 %v331, 3
    %v349 = vand.u32 %v348, 3
    %vm350 = vcmp.lt.s32.totalorder %v349, 2
    %vm351 = vcmp.eq.s32.totalorder %v349, 0
    %v352 = vxor.u32 %v346, 2147483648
    %v353 = vsel %vm351, %v338, %v352
    %vm354 = vcmp.eq.s32.totalorder %v349, 2
    %v355 = vxor.u32 %v338, 2147483648
    %v356 = vsel %vm354, %v355, %v346
    %v357 = vsel %vm350, %v353, %v356
    %v358 = vsel %vm347, nan, %v357
    %v359 = vsel %vm49, %v203, %v358
    %v360 = vld [vmem:[%s4] sm:$0xff]
    %v361 = vld [vmem:[%s4 + $0x8] sm:$0xff]
    %v362 = vld [vmem:[%s4 + $0x10] sm:$0xff]
    %v363 = vld [vmem:[%s4 + $0x18] sm:$0xff]
    %v364 = vld [vmem:[%s4 + $0x20] sm:$0xff]
    %v365 = vld [vmem:[%s4 + $0x28] sm:$0xff]
    %v366 = vld [vmem:[%s4 + $0x30] sm:$0xff]
    %v367 = vld [vmem:[%s4 + $0x38] sm:$0xff]
    %v368 = vld [vmem:[%s4 + $0x40] sm:$0xff]
    %v369 = vld [vmem:[%s4 + $0x48] sm:$0xff]
    %v370 = vld [vmem:[%s4 + $0x50] sm:$0xff]
    %v371 = vld [vmem:[%s4 + $0x58] sm:$0xff]
    %v372 = vld [vmem:[%s4 + $0x60] sm:$0xff]
    %v373 = vld [vmem:[%s4 + $0x68] sm:$0xff]
    %v374 = vld [vmem:[%s4 + $0x70] sm:$0xff]
    %v375 = vld [vmem:[%s4 + $0x78] sm:$0xff]
    %v376 = vld [vmem:[%s3] sm:$0x1]
    %v377 = vperm.slane %v376, 0
    %378 = vmatpush.msra.mxu0 %v375
    %379 = vmatpush.msra.mxu0 %v374
    %380 = vmatpush.msra.mxu0 %v373
    %381 = vmatpush.msra.mxu0 %v372
    %382 = vmatpush.msra.mxu0 %v371
    %383 = vmatpush.msra.mxu0 %v370
    %384 = vmatpush.msra.mxu0 %v369
    %385 = vmatpush.msra.mxu0 %v368
    %386 = vmatpush.msra.mxu0 %v367
    %387 = vmatpush.msra.mxu0 %v366
    %388 = vmatpush.msra.mxu0 %v365
    %389 = vmatpush.msra.mxu0 %v364
    %390 = vmatpush.msra.mxu0 %v363
    %391 = vmatpush.msra.mxu0 %v362
    %392 = vmatpush.msra.mxu0 %v361
    %393 = vmatpush.msra.mxu0 %v360
    %394 = vmatmul.f32.gmra.mxu0 %v359
    %v395 = vpop.f32.mrf.mxu0
    %v396 = vadd.f32 %v377, %v395
    %397 = vdwg.mxu0
    %v398 = vsub.f32 0.0, %v396
    %v399 = vmul.f32 %v398, 1.442695
    %v400 = vpow.pop %v399
    %v401 = vadd.f32 %v400, 1.0
    %v402 = vrcp.pop %v401
    %v403 = vmul.f32 %v401, %v402
    %v404 = vsub.f32 1.0, %v403
    %v405 = vmul.f32 %v402, %v404
    %v406 = vadd.f32 %v402, %v405
    %vm407 = vweird.f32 %v401
    %vm408 = vweird.f32 %v402
    %vm409 = vmor %vm407, %vm408
    %v410 = vsel %vm409, %v402, %v406
    %v411 = vand.u32 2147483647, %v401
    %vm412 = vcmp.eq.f32.partialorder %v411, 8.507059e+37
    %v413 = vand.u32 %v401, 2147483648
    %v414 = vor.u32 1.1754944e-38, %v413
    %v415 = vsel %vm412, %v414, %v410
    %v416 = vmul.f32 1.0, %v415
    %v417 = vmul.f32 %v396, %v416
    %v418 = vld [vmem:[%s5] sm:$0xff]
    %v419 = vld [vmem:[%s5 + $0x8] sm:$0xff]
    %v420 = vld [vmem:[%s5 + $0x10] sm:$0xff]
    %v421 = vld [vmem:[%s5 + $0x18] sm:$0xff]
    %v422 = vld [vmem:[%s5 + $0x20] sm:$0xff]
    %v423 = vld [vmem:[%s5 + $0x28] sm:$0xff]
    %v424 = vld [vmem:[%s5 + $0x30] sm:$0xff]
    %v425 = vld [vmem:[%s5 + $0x38] sm:$0xff]
    %v426 = vld [vmem:[%s5 + $0x40] sm:$0xff]
    %v427 = vld [vmem:[%s5 + $0x48] sm:$0xff]
    %v428 = vld [vmem:[%s5 + $0x50] sm:$0xff]
    %v429 = vld [vmem:[%s5 + $0x58] sm:$0xff]
    %v430 = vld [vmem:[%s5 + $0x60] sm:$0xff]
    %v431 = vld [vmem:[%s5 + $0x68] sm:$0xff]
    %v432 = vld [vmem:[%s5 + $0x70] sm:$0xff]
    %v433 = vld [vmem:[%s5 + $0x78] sm:$0xff]
    %v434 = vld [vmem:[%s3 + $0x1] sm:$0x1]
    %v435 = vperm.slane %v434, 0
    %436 = vmatpush.msra.mxu0 %v433
    %437 = vmatpush.msra.mxu0 %v432
    %438 = vmatpush.msra.mxu0 %v431
    %439 = vmatpush.msra.mxu0 %v430
    %440 = vmatpush.msra.mxu0 %v429
    %441 = vmatpush.msra.mxu0 %v428
    %442 = vmatpush.msra.mxu0 %v427
    %443 = vmatpush.msra.mxu0 %v426
    %444 = vmatpush.msra.mxu0 %v425
    %445 = vmatpush.msra.mxu0 %v424
    %446 = vmatpush.msra.mxu0 %v423
    %447 = vmatpush.msra.mxu0 %v422
    %448 = vmatpush.msra.mxu0 %v421
    %449 = vmatpush.msra.mxu0 %v420
    %450 = vmatpush.msra.mxu0 %v419
    %451 = vmatpush.msra.mxu0 %v418
    %452 = vmatmul.f32.gmra.mxu0 %v417
    %v453 = vpop.f32.mrf.mxu0
    %v454 = vadd.f32 %v435, %v453
    %455 = vdwg.mxu0
    %v456 = vld [vmem:[%s2] sm:$0xff]
    %v457 = vld [vmem:[%s6] sm:$0xff]
    %v458 = vld [vmem:[%s6 + $0x8] sm:$0xff]
    %v459 = vld [vmem:[%s3 + $0x2] sm:$0x1]
    %v460 = vperm.slane %v459, 0
    %vm461 = vcmask 130048
    %v463 = vsel %vm461, %v456, 0
    %465 = vmatpush.msra.mxu0 0.0
    %466 = vmatpush.msra.mxu0 0.0
    %467 = vmatpush.msra.mxu0 0.0
    %468 = vmatpush.msra.mxu0 0.0
    %469 = vmatpush.msra.mxu0 0.0
    %470 = vmatpush.msra.mxu0 0.0
    %471 = vmatpush.msra.mxu0 0.0
    %472 = vmatpush.msra.mxu0 0.0
    %473 = vmatpush.msra.mxu0 0.0
    %474 = vmatpush.msra.mxu0 0.0
    %475 = vmatpush.msra.mxu0 0.0
    %476 = vmatpush.msra.mxu0 0.0
    %477 = vmatpush.msra.mxu0 0.0
    %478 = vmatpush.msra.mxu0 0.0
    %479 = vmatpush.msra.mxu0 %v458
    %480 = vmatpush.msra.mxu0 %v457
    %481 = vmatmul.f32.gmra.mxu0 %v463
    %v482 = vpop.f32.mrf.mxu0
    %v483 = vadd.f32 %v460, %v482
    %484 = vdwg.mxu0
    %v485 = vadd.f32 %v483, %v454
    %v486 = vld [vmem:[%s7] sm:$0xff]
    %v487 = vld [vmem:[%s7 + $0x8] sm:$0xff]
    %v488 = vld [vmem:[%s7 + $0x10] sm:$0xff]
    %v489 = vld [vmem:[%s7 + $0x18] sm:$0xff]
    %v490 = vld [vmem:[%s7 + $0x20] sm:$0xff]
    %v491 = vld [vmem:[%s7 + $0x28] sm:$0xff]
    %v492 = vld [vmem:[%s7 + $0x30] sm:$0xff]
    %v493 = vld [vmem:[%s7 + $0x38] sm:$0xff]
    %v494 = vld [vmem:[%s7 + $0x40] sm:$0xff]
    %v495 = vld [vmem:[%s7 + $0x48] sm:$0xff]
    %v496 = vld [vmem:[%s7 + $0x50] sm:$0xff]
    %v497 = vld [vmem:[%s7 + $0x58] sm:$0xff]
    %v498 = vld [vmem:[%s7 + $0x60] sm:$0xff]
    %v499 = vld [vmem:[%s7 + $0x68] sm:$0xff]
    %v500 = vld [vmem:[%s7 + $0x70] sm:$0xff]
    %v501 = vld [vmem:[%s7 + $0x78] sm:$0xff]
    %v502 = vld [vmem:[%s3 + $0x3] sm:$0x1]
    %v503 = vperm.slane %v502, 0
    %504 = vmatpush.msra.mxu0 %v501
    %505 = vmatpush.msra.mxu0 %v500
    %506 = vmatpush.msra.mxu0 %v499
    %507 = vmatpush.msra.mxu0 %v498
    %508 = vmatpush.msra.mxu0 %v497
    %509 = vmatpush.msra.mxu0 %v496
    %510 = vmatpush.msra.mxu0 %v495
    %511 = vmatpush.msra.mxu0 %v494
    %512 = vmatpush.msra.mxu0 %v493
    %513 = vmatpush.msra.mxu0 %v492
    %514 = vmatpush.msra.mxu0 %v491
    %515 = vmatpush.msra.mxu0 %v490
    %516 = vmatpush.msra.mxu0 %v489
    %517 = vmatpush.msra.mxu0 %v488
    %518 = vmatpush.msra.mxu0 %v487
    %519 = vmatpush.msra.mxu0 %v486
    %520 = vmatmul.f32.gmra.mxu0 %v485
    %v521 = vpop.f32.mrf.mxu0
    %v522 = vadd.f32 %v503, %v521
    %523 = vdwg.mxu0
    %v524 = vmax.f32 %v522, 0.0
    %v525 = vld [vmem:[%s8] sm:$0xff]
    %v526 = vld [vmem:[%s8 + $0x8] sm:$0xff]
    %v527 = vld [vmem:[%s8 + $0x10] sm:$0xff]
    %v528 = vld [vmem:[%s8 + $0x18] sm:$0xff]
    %v529 = vld [vmem:[%s8 + $0x20] sm:$0xff]
    %v530 = vld [vmem:[%s8 + $0x28] sm:$0xff]
    %v531 = vld [vmem:[%s8 + $0x30] sm:$0xff]
    %v532 = vld [vmem:[%s8 + $0x38] sm:$0xff]
    %v533 = vld [vmem:[%s8 + $0x40] sm:$0xff]
    %v534 = vld [vmem:[%s8 + $0x48] sm:$0xff]
    %v535 = vld [vmem:[%s8 + $0x50] sm:$0xff]
    %v536 = vld [vmem:[%s8 + $0x58] sm:$0xff]
    %v537 = vld [vmem:[%s8 + $0x60] sm:$0xff]
    %v538 = vld [vmem:[%s8 + $0x68] sm:$0xff]
    %v539 = vld [vmem:[%s8 + $0x70] sm:$0xff]
    %v540 = vld [vmem:[%s8 + $0x78] sm:$0xff]
    %v541 = vld [vmem:[%s3 + $0x4] sm:$0x1]
    %v542 = vperm.slane %v541, 0
    %543 = vmatpush.msra.mxu0 %v540
    %544 = vmatpush.msra.mxu0 %v539
    %545 = vmatpush.msra.mxu0 %v538
    %546 = vmatpush.msra.mxu0 %v537
    %547 = vmatpush.msra.mxu0 %v536
    %548 = vmatpush.msra.mxu0 %v535
    %549 = vmatpush.msra.mxu0 %v534
    %550 = vmatpush.msra.mxu0 %v533
    %551 = vmatpush.msra.mxu0 %v532
    %552 = vmatpush.msra.mxu0 %v531
    %553 = vmatpush.msra.mxu0 %v530
    %554 = vmatpush.msra.mxu0 %v529
    %555 = vmatpush.msra.mxu0 %v528
    %556 = vmatpush.msra.mxu0 %v527
    %557 = vmatpush.msra.mxu0 %v526
    %558 = vmatpush.msra.mxu0 %v525
    %559 = vmatmul.f32.gmra.mxu0 %v524
    %v560 = vpop.f32.mrf.mxu0
    %v561 = vadd.f32 %v542, %v560
    %562 = vdwg.mxu0
    %v563 = vmax.f32 %v561, 0.0
    %v564 = vld [vmem:[%s9] sm:$0xff]
    %v565 = vld [vmem:[%s9 + $0x8] sm:$0xff]
    %v566 = vld [vmem:[%s9 + $0x10] sm:$0xff]
    %v567 = vld [vmem:[%s9 + $0x18] sm:$0xff]
    %v568 = vld [vmem:[%s9 + $0x20] sm:$0xff]
    %v569 = vld [vmem:[%s9 + $0x28] sm:$0xff]
    %v570 = vld [vmem:[%s9 + $0x30] sm:$0xff]
    %v571 = vld [vmem:[%s9 + $0x38] sm:$0xff]
    %v572 = vld [vmem:[%s9 + $0x40] sm:$0xff]
    %v573 = vld [vmem:[%s9 + $0x48] sm:$0xff]
    %v574 = vld [vmem:[%s9 + $0x50] sm:$0xff]
    %v575 = vld [vmem:[%s9 + $0x58] sm:$0xff]
    %v576 = vld [vmem:[%s9 + $0x60] sm:$0xff]
    %v577 = vld [vmem:[%s9 + $0x68] sm:$0xff]
    %v578 = vld [vmem:[%s9 + $0x70] sm:$0xff]
    %v579 = vld [vmem:[%s9 + $0x78] sm:$0xff]
    %v580 = vld [vmem:[%s3 + $0x5] sm:$0x1]
    %v581 = vperm.slane %v580, 0
    %582 = vmatpush.msra.mxu0 %v579
    %583 = vmatpush.msra.mxu0 %v578
    %584 = vmatpush.msra.mxu0 %v577
    %585 = vmatpush.msra.mxu0 %v576
    %586 = vmatpush.msra.mxu0 %v575
    %587 = vmatpush.msra.mxu0 %v574
    %588 = vmatpush.msra.mxu0 %v573
    %589 = vmatpush.msra.mxu0 %v572
    %590 = vmatpush.msra.mxu0 %v571
    %591 = vmatpush.msra.mxu0 %v570
    %592 = vmatpush.msra.mxu0 %v569
    %593 = vmatpush.msra.mxu0 %v568
    %594 = vmatpush.msra.mxu0 %v567
    %595 = vmatpush.msra.mxu0 %v566
    %596 = vmatpush.msra.mxu0 %v565
    %597 = vmatpush.msra.mxu0 %v564
    %598 = vmatmul.f32.gmra.mxu0 %v563
    %v599 = vpop.f32.mrf.mxu0
    %v600 = vadd.f32 %v581, %v599
    %601 = vdwg.mxu0
    %602 = vst [vmem:[#allocation2] sm:$0xff] %v600
    // Predicated region
    $region42: #{mlp_diffusion_forward.1} parent=1 // pred_check
      _
    $region43: #{mlp_diffusion_forward.1} parent=1 // pred_check_branch
      %604 = sbr.rel (0) target = $region45
    $region44: #{mlp_diffusion_forward.1} parent=1 // pred_region
      %606 = vsyncadd [#allocation3], 0
      %s608 = sshll.u32 [#allocation2], 4
      %s609 = int_to_ptr.vmem [resolvable:$true] %s608
      %s610 = sshll.u32 %s10, 4
      %s611 = int_to_ptr.hbm [resolvable:$true] %s610
      %613 = dma.vmem_to_hbm [thread:$0]  %s609, 128, %s611, [#allocation3]
    $region45: #{mlp_diffusion_forward.1} parent=1 // pred_fallthru
      _
    // Predicated region
    $region46: #{mlp_diffusion_forward.1} parent=1 // pred_check
      _
    $region47: #{mlp_diffusion_forward.1} parent=1 // pred_check_branch
      %615 = sbr.rel (0) target = $region49
    $region48: #{mlp_diffusion_forward.1} parent=1 // pred_region
      %617 = dma.done [#allocation3], 128
    $region49: #{mlp_diffusion_forward.1} parent=1 // pred_fallthru
      _
    %618 = vsyncpa [#allocation3], 1

</llo_original>
